<compile_context>
chip_gen: v7x
topology: tpu7x:2x2x1
jax: 0.10.0
libtpu: 0.0.40
codegen_flags: <defaults>
</compile_context>

<pallas_src>
import functools

import jax
import jax.numpy as jnp
from jax import lax
from jax.experimental import pallas as pl
from jax.experimental.pallas import tpu as pltpu

_LANE = 128
_NEG = -9e15


def _round_up(v, m):
    return ((v + m - 1) // m) * m


def _pad2d(a, rows, cols):
    out = jnp.zeros((rows, cols), a.dtype)
    return out.at[: a.shape[0], : a.shape[1]].set(a)


def _vmem_limit_bytes():
    """Generation-aware scoped-VMEM cap (v7x: 64 MiB physical; v4-v6: 128 MiB)."""
    try:
        kind = jax.devices()[0].device_kind.lower()
    except Exception:
        return 64 * 1024 * 1024
    if "v7" in kind:
        return 48 * 1024 * 1024
    if any(t in kind for t in ("v4", "v5", "v6")):
        return 100 * 1024 * 1024
    return 32 * 1024 * 1024


# ---------------------------------------------------------------------------
# Fused kernel: one GAT layer per grid step, activations resident in VMEM.
# ---------------------------------------------------------------------------
def _ae_gat_kernel(x0_ref, bias_ref, w_ref, a2w_ref, h_ref, xhat_ref,
                   x_state, *, num_enc, att_col):
    layer = pl.program_id(0)

    @pl.when(layer == 0)
    def _():
        x_state[...] = x0_ref[...]

    x_bf = x_state[...]                               # (N, F) bf16, zero-padded
    w = w_ref[0]                                      # (F, F) bf16; col att_col holds W @ a_self^T
    a2w = a2w_ref[0]                                  # (1, F) bf16 = a_neigh @ W^T

    # One MXU pass gives both h = xW and the self-logit column
    # f1_i = x_i . (W a_self^T), packed into an otherwise-zero padding column.
    hf = jnp.dot(x_bf, w, preferred_element_type=jnp.float32)        # (N, F)
    f1 = hf[:, att_col:att_col + 1]                                  # (N, 1)

    # Neighbour-logit row, produced lane-dense: f2_j = x_j . (W a_neigh^T).
    nt = (((1,), (1,)), ((), ()))                     # contract feature axes
    f2 = lax.dot_general(a2w, x_bf, nt,
                         preferred_element_type=jnp.float32)         # (1, N)

    # e_ij = LeakyReLU_0.2(f1_i + f2_j) + additive -9e15 adjacency mask (f32).
    e = f1 + f2                                       # (N, N) broadcast sum
    e = jnp.maximum(e, 0.2 * e)                       # LeakyReLU, one VPU op
    e = e + bias_ref[...]

    # Row-wise stable softmax; normalization is deferred until after the
    # aggregation ((p @ h) * 1/rowsum == softmax(e) @ h), so the divide touches
    # (N, F) instead of (N, N). Reciprocal runs on the EUP slot.
    e = e - jnp.max(e, axis=-1, keepdims=True)
    p = jnp.exp(e)
    denom = jnp.sum(p, axis=-1, keepdims=True)        # (N, 1) f32

    hp = jnp.dot(p.astype(jnp.bfloat16), hf.astype(jnp.bfloat16),
                 preferred_element_type=jnp.float32)                 # (N, F)
    hp = hp * pl.reciprocal(denom, approx=True)

    # ELU (alpha=1); exp(min(x,0)) avoids spurious infs for large positives.
    out = jnp.where(hp > 0, hp, jnp.exp(jnp.minimum(hp, 0.0)) - 1.0)
    out_bf = out.astype(jnp.bfloat16)
    x_state[...] = out_bf

    # Latent h: its output block has a constant index map, so it stays resident
    # in VMEM for the whole grid and is written back to HBM once at the end.
    @pl.when(layer == num_enc - 1)
    def _():
        h_ref[...] = out_bf

    @pl.when(layer == pl.num_programs(0) - 1)
    def _():
        xhat_ref[...] = out_bf


def _ae_gat_pallas(x_pad, adj_bias, w_all, a2w_all, *, num_enc, att_col):
    n, f_pad = x_pad.shape
    num_layers = w_all.shape[0]
    kernel = functools.partial(_ae_gat_kernel, num_enc=num_enc, att_col=att_col)
    return pl.pallas_call(
        kernel,
        out_shape=(jax.ShapeDtypeStruct((n, f_pad), jnp.bfloat16),
                   jax.ShapeDtypeStruct((n, f_pad), jnp.bfloat16)),
        grid=(num_layers,),
        in_specs=[
            # Constant-index blocks: single-buffered (no overlap benefit, half
            # the resident VMEM).
            pl.BlockSpec((n, f_pad), lambda l: (0, 0),
                         pipeline_mode=pl.Buffered(1)),               # x0
            pl.BlockSpec((n, n), lambda l: (0, 0),
                         pipeline_mode=pl.Buffered(1)),               # adj bias (f32)
            # Per-layer weights: streamed / double-buffered (default).
            pl.BlockSpec((1, f_pad, f_pad), lambda l: (l, 0, 0)),     # W (+ packed a_self col)
            pl.BlockSpec((1, 1, f_pad), lambda l: (l, 0, 0)),         # a_neigh @ W^T
        ],
        out_specs=(pl.BlockSpec((n, f_pad), lambda l: (0, 0)),
                   pl.BlockSpec((n, f_pad), lambda l: (0, 0))),
        scratch_shapes=[pltpu.VMEM((n, f_pad), jnp.bfloat16)],        # resident activations
        compiler_params=pltpu.CompilerParams(
            dimension_semantics=("arbitrary",),        # layer axis is sequential
            vmem_limit_bytes=_vmem_limit_bytes()),
    )(x_pad, adj_bias, w_all, a2w_all)


# ---------------------------------------------------------------------------
# AE_GAT wrapper: pack/pad parameters, build the bias mask, run fused kernel.
# ---------------------------------------------------------------------------
def _init_gat_params(key, fin, fout):
    k1, k2, k3 = jax.random.split(key, 3)
    w = jax.random.normal(k1, (fin, fout), jnp.float32) / jnp.sqrt(fin)
    a1 = jax.random.normal(k2, (1, fout), jnp.float32) / jnp.sqrt(fout)
    a2 = jax.random.normal(k3, (1, fout), jnp.float32) / jnp.sqrt(fout)
    return w, a1, a2


def init_ae_gat(key, dim_input, dims_encoder, dims_decoder):
    dims_en = [dim_input] + list(dims_encoder)
    dims_de = list(dims_decoder) + [dim_input]
    num_layer = len(dims_en) - 1
    enc, dec = [], []
    for idx in range(num_layer):
        key, ke, kd = jax.random.split(key, 3)
        enc.append(_init_gat_params(ke, dims_en[idx], dims_en[idx + 1]))
        dec.append(_init_gat_params(kd, dims_de[idx], dims_de[idx + 1]))
    return enc, dec


@jax.jit
def ae_gat_forward(x, adj, enc_params, dec_params):
    params = list(enc_params) + list(dec_params)
    n = x.shape[0]

    # Lane-dense padding: features to a multiple of 128 with at least one spare
    # (zero-row) column to hold the packed self-attention logit; nodes to 128.
    max_dim = max([x.shape[1]] + [w.shape[1] for (w, _, _) in params])
    f_pad = _round_up(max_dim, _LANE)
    if f_pad - max_dim < 1:
        f_pad += _LANE
    att_col = f_pad - 1          # >= max_dim, so its garbage hits zero W rows
    n_pad = _round_up(n, _LANE)

    # Pack per-layer weights: W zero-padded to (f_pad, f_pad) with column
    # `att_col` = W @ a_self^T (f1 comes out of the main matmul for free), plus
    # a separate (1, f_pad) row a_neigh @ W^T for the lane-dense f2 dot.
    w_blocks, a2w_blocks = [], []
    for (w, a1, a2) in params:
        wp = _pad2d(w, f_pad, f_pad)
        wp = wp.at[: w.shape[0], att_col:att_col + 1].set(jnp.dot(w, a1.T))
        w_blocks.append(wp)
        a2w_blocks.append(_pad2d(jnp.dot(a2, w.T), 1, f_pad))
    w_all = jnp.stack(w_blocks).astype(jnp.bfloat16)       # (L, F, F)
    a2w_all = jnp.stack(a2w_blocks).astype(jnp.bfloat16)   # (L, 1, F)

    x_pad = _pad2d(x.astype(jnp.float32), n_pad, f_pad).astype(jnp.bfloat16)

    # Additive f32 mask: 0 on edges, -9e15 elsewhere. Padded rows get a self
    # edge so their softmax stays well-defined and they remain exactly zero.
    adj_bias = jnp.full((n_pad, n_pad), _NEG, jnp.float32)
    adj_bias = adj_bias.at[:n, :n].set(
        jnp.where(adj > 0, 0.0, _NEG).astype(jnp.float32))
    if n_pad > n:
        pad_ids = jnp.arange(n, n_pad)
        adj_bias = adj_bias.at[pad_ids, pad_ids].set(0.0)

    h_pad, xhat_pad = _ae_gat_pallas(x_pad, adj_bias, w_all, a2w_all,
                                     num_enc=len(enc_params), att_col=att_col)
    h = h_pad[:n, : enc_params[-1][0].shape[1]].astype(jnp.float32)
    x_hat = xhat_pad[:n, : dec_params[-1][0].shape[1]].astype(jnp.float32)
    return h, x_hat


if __name__ == "__main__":
    key = jax.random.PRNGKey(0)
    k_x, k_adj, k_params = jax.random.split(key, 3)

    # Small, self-consistent shapes: 8 nodes, 16-dim input features.
    N = 8
    dim_input = 16
    dims_encoder = [32, 8]
    dims_decoder = [8, 32]

    x = jax.random.normal(k_x, (N, dim_input), jnp.float32)

    # Dense 0/1 adjacency with self-loops so every softmax row has an edge.
    adj = (jax.random.uniform(k_adj, (N, N)) > 0.5).astype(jnp.float32)
    adj = jnp.maximum(adj, jnp.eye(N, dtype=jnp.float32))

    enc_params, dec_params = init_ae_gat(k_params, dim_input, dims_encoder,
                                         dims_decoder)

    h, x_hat = ae_gat_forward(x, adj, enc_params, dec_params)
    jax.block_until_ready((h, x_hat))

    assert h.shape == (N, dims_encoder[-1])
    assert x_hat.shape == (N, dim_input)
    assert bool(jnp.all(jnp.isfinite(h))) and bool(jnp.all(jnp.isfinite(x_hat)))
    print("KERNEL_OK")
</pallas_src>

<mosaic_0001>
module attributes {stable_mosaic.version = 11 : i64} {
  func.func @_ae_gat_kernel(%arg0: i32, %arg1: memref<128x128xbf16, #tpu.memory_space<vmem>>, %arg2: memref<128x128xf32, #tpu.memory_space<vmem>>, %arg3: memref<1x128x128xbf16, #tpu.memory_space<vmem>>, %arg4: memref<1x1x128xbf16, #tpu.memory_space<vmem>>, %arg5: memref<128x128xbf16, #tpu.memory_space<vmem>>, %arg6: memref<128x128xbf16, #tpu.memory_space<vmem>>, %arg7: memref<128x128xbf16, #tpu.memory_space<vmem>>) attributes {dimension_semantics = [#tpu.dimension_semantics<arbitrary>], iteration_bounds = array<i64: 4>, scalar_prefetch = 0 : i64, scratch_operands = 1 : i64, tpu.core_type = #tpu.core_type<tc>, window_params = [{pipeline_mode = #tpu.pipeline_mode<synchronous>, transform_indices = @transform_0, window_bounds = array<i64: 128, 128>}, {pipeline_mode = #tpu.pipeline_mode<synchronous>, transform_indices = @transform_1, window_bounds = array<i64: 128, 128>}, {transform_indices = @transform_2, window_bounds = array<i64: 1, 128, 128>}, {transform_indices = @transform_3, window_bounds = array<i64: 1, 1, 128>}, {pipeline_mode = #tpu.pipeline_mode<synchronous>, transform_indices = @transform_4, window_bounds = array<i64: 128, 128>}, {pipeline_mode = #tpu.pipeline_mode<synchronous>, transform_indices = @transform_5, window_bounds = array<i64: 128, 128>}]} {
    %c0_i32 = arith.constant 0 : i32
    %0 = arith.cmpi eq, %arg0, %c0_i32 : i32
    %1 = arith.extui %0 : i1 to i32
    %c0_i32_0 = arith.constant 0 : i32
    %2 = arith.cmpi ne, %1, %c0_i32_0 : i32
    scf.if %2 {
      %c0_22 = arith.constant 0 : index
      %c0_23 = arith.constant 0 : index
      %48 = vector.load %arg1[%c0_22, %c0_23] : memref<128x128xbf16, #tpu.memory_space<vmem>>, vector<128x128xbf16>
      %c0_24 = arith.constant 0 : index
      %c0_25 = arith.constant 0 : index
      %49 = vector.load %arg7[%c0_24, %c0_25] : memref<128x128xbf16, #tpu.memory_space<vmem>>, vector<128x128xbf16>
      tpu.vector_store %arg7[%c0_24, %c0_25], %48 {strides = array<i32>} : memref<128x128xbf16, #tpu.memory_space<vmem>>, vector<128x128xbf16>,
    } else {
    }
    %c0 = arith.constant 0 : index
    %c0_1 = arith.constant 0 : index
    %3 = vector.load %arg7[%c0, %c0_1] : memref<128x128xbf16, #tpu.memory_space<vmem>>, vector<128x128xbf16>
    %c0_2 = arith.constant 0 : index
    %c0_3 = arith.constant 0 : index
    %c0_4 = arith.constant 0 : index
    %4 = vector.load %arg3[%c0_2, %c0_3, %c0_4] : memref<1x128x128xbf16, #tpu.memory_space<vmem>>, vector<1x128x128xbf16>
    %5 = vector.shape_cast %4 : vector<1x128x128xbf16> to vector<128x128xbf16>
    %c0_5 = arith.constant 0 : index
    %c0_6 = arith.constant 0 : index
    %c0_7 = arith.constant 0 : index
    %6 = vector.load %arg4[%c0_5, %c0_6, %c0_7] : memref<1x1x128xbf16, #tpu.memory_space<vmem>>, vector<1x1x128xbf16>
    %7 = vector.shape_cast %6 : vector<1x1x128xbf16> to vector<1x128xbf16>
    %cst = arith.constant dense<0.000000e+00> : vector<128x128xf32>
    %8 = tpu.matmul %3, %5, %cst {dimension_numbers = #tpu.dot_dimension_numbers<[1], [0], [0], [1], [0, 0, 1, 1], [], []>} : vector<128x128xbf16>, vector<128x128xbf16>, vector<128x128xf32> -> vector<128x128xf32>
    %9 = vector.extract_strided_slice %8 {offsets = [0, 127], sizes = [128, 1], strides = [1, 1]} : vector<128x128xf32> to vector<128x1xf32>
    %cst_8 = arith.constant dense<0.000000e+00> : vector<1x128xf32>
    %10 = tpu.matmul %7, %3, %cst_8 {dimension_numbers = #tpu.dot_dimension_numbers<[1], [1], [0], [0], [0, 0, 1, 0], [], []>} : vector<1x128xbf16>, vector<128x128xbf16>, vector<1x128xf32> -> vector<1x128xf32>
    %11 = vector.broadcast %9 : vector<128x1xf32> to vector<128x128xf32>
    %12 = vector.broadcast %10 : vector<1x128xf32> to vector<128x128xf32>
    %13 = arith.addf %11, %12 : vector<128x128xf32>
    %cst_9 = arith.constant 2.000000e-01 : f32
    %14 = vector.broadcast %cst_9 : f32 to vector<128x128xf32>
    %15 = arith.mulf %14, %13 : vector<128x128xf32>
    %16 = arith.maximumf %13, %15 : vector<128x128xf32>
    %c0_10 = arith.constant 0 : index
    %c0_11 = arith.constant 0 : index
    %17 = vector.load %arg2[%c0_10, %c0_11] : memref<128x128xf32, #tpu.memory_space<vmem>>, vector<128x128xf32>
    %18 = arith.addf %16, %17 : vector<128x128xf32>
    %cst_12 = arith.constant dense<0xFF800000> : vector<128xf32>
    %19 = vector.multi_reduction <maximumf>, %18, %cst_12 [1] : vector<128x128xf32> to vector<128xf32>
    %20 = vector.shape_cast %19 : vector<128xf32> to vector<128x1xf32>
    %21 = vector.broadcast %20 : vector<128x1xf32> to vector<128x128xf32>
    %22 = arith.subf %18, %21 : vector<128x128xf32>
    %23 = math.exp %22 : vector<128x128xf32>
    %cst_13 = arith.constant dense<0.000000e+00> : vector<128xf32>
    %24 = vector.multi_reduction <add>, %23, %cst_13 [1] : vector<128x128xf32> to vector<128xf32>
    %25 = vector.shape_cast %24 : vector<128xf32> to vector<128x1xf32>
    %26 = arith.truncf %23 : vector<128x128xf32> to vector<128x128xbf16>
    %27 = arith.truncf %8 : vector<128x128xf32> to vector<128x128xbf16>
    %cst_14 = arith.constant dense<0.000000e+00> : vector<128x128xf32>
    %28 = tpu.matmul %26, %27, %cst_14 {dimension_numbers = #tpu.dot_dimension_numbers<[1], [0], [0], [1], [0, 0, 1, 1], [], []>} : vector<128x128xbf16>, vector<128x128xbf16>, vector<128x128xf32> -> vector<128x128xf32>
    %29 = tpu.reciprocal %25 {approx = true} : vector<128x1xf32> -> vector<128x1xf32>
    %30 = vector.broadcast %29 : vector<128x1xf32> to vector<128x128xf32>
    %31 = arith.mulf %28, %30 : vector<128x128xf32>
    %cst_15 = arith.constant 0.000000e+00 : f32
    %32 = vector.broadcast %cst_15 : f32 to vector<128x128xf32>
    %33 = arith.cmpf ogt, %31, %32 : vector<128x128xf32>
    %cst_16 = arith.constant 0.000000e+00 : f32
    %34 = vector.broadcast %cst_16 : f32 to vector<128x128xf32>
    %35 = arith.minimumf %31, %34 : vector<128x128xf32>
    %36 = math.exp %35 : vector<128x128xf32>
    %cst_17 = arith.constant 1.000000e+00 : f32
    %37 = vector.broadcast %cst_17 : f32 to vector<128x128xf32>
    %38 = arith.subf %36, %37 : vector<128x128xf32>
    %39 = arith.select %33, %31, %38 : vector<128x128xi1>, vector<128x128xf32>
    %40 = arith.truncf %39 : vector<128x128xf32> to vector<128x128xbf16>
    %c0_18 = arith.constant 0 : index
    %c0_19 = arith.constant 0 : index
    %41 = vector.load %arg7[%c0_18, %c0_19] : memref<128x128xbf16, #tpu.memory_space<vmem>>, vector<128x128xbf16>
    tpu.vector_store %arg7[%c0_18, %c0_19], %40 {strides = array<i32>} : memref<128x128xbf16, #tpu.memory_space<vmem>>, vector<128x128xbf16>,
    %c1_i32 = arith.constant 1 : i32
    %42 = arith.cmpi eq, %arg0, %c1_i32 : i32
    %43 = arith.extui %42 : i1 to i32
    %c0_i32_20 = arith.constant 0 : i32
    %44 = arith.cmpi ne, %43, %c0_i32_20 : i32
    scf.if %44 {
      %c0_22 = arith.constant 0 : index
      %c0_23 = arith.constant 0 : index
      %48 = vector.load %arg5[%c0_22, %c0_23] : memref<128x128xbf16, #tpu.memory_space<vmem>>, vector<128x128xbf16>
      tpu.vector_store %arg5[%c0_22, %c0_23], %40 {strides = array<i32>} : memref<128x128xbf16, #tpu.memory_space<vmem>>, vector<128x128xbf16>,
    } else {
    }
    %c3_i32 = arith.constant 3 : i32
    %45 = arith.cmpi eq, %arg0, %c3_i32 : i32
    %46 = arith.extui %45 : i1 to i32
    %c0_i32_21 = arith.constant 0 : i32
    %47 = arith.cmpi ne, %46, %c0_i32_21 : i32
    scf.if %47 {
      %c0_22 = arith.constant 0 : index
      %c0_23 = arith.constant 0 : index
      %48 = vector.load %arg6[%c0_22, %c0_23] : memref<128x128xbf16, #tpu.memory_space<vmem>>, vector<128x128xbf16>
      tpu.vector_store %arg6[%c0_22, %c0_23], %40 {strides = array<i32>} : memref<128x128xbf16, #tpu.memory_space<vmem>>, vector<128x128xbf16>,
    } else {
    }
    return
  }
  func.func @transform_0(%arg0: i32) -> (i32, i32) {
    %c0_i32 = arith.constant 0 : i32
    %c0_i32_0 = arith.constant 0 : i32
    %c0_i32_1 = arith.constant 0 : i32
    return %c0_i32, %c0_i32_0 : i32, i32
  }
  func.func @transform_1(%arg0: i32) -> (i32, i32) {
    %c0_i32 = arith.constant 0 : i32
    %c0_i32_0 = arith.constant 0 : i32
    %c0_i32_1 = arith.constant 0 : i32
    return %c0_i32, %c0_i32_0 : i32, i32
  }
  func.func @transform_2(%arg0: i32) -> (i32, i32, i32) {
    %c0_i32 = arith.constant 0 : i32
    %c0_i32_0 = arith.constant 0 : i32
    %c0_i32_1 = arith.constant 0 : i32
    return %arg0, %c0_i32, %c0_i32_0 : i32, i32, i32
  }
  func.func @transform_3(%arg0: i32) -> (i32, i32, i32) {
    %c0_i32 = arith.constant 0 : i32
    %c0_i32_0 = arith.constant 0 : i32
    %c0_i32_1 = arith.constant 0 : i32
    return %arg0, %c0_i32, %c0_i32_0 : i32, i32, i32
  }
  func.func @transform_4(%arg0: i32) -> (i32, i32) {
    %c0_i32 = arith.constant 0 : i32
    %c0_i32_0 = arith.constant 0 : i32
    %c0_i32_1 = arith.constant 0 : i32
    return %c0_i32, %c0_i32_0 : i32, i32
  }
  func.func @transform_5(%arg0: i32) -> (i32, i32) {
    %c0_i32 = arith.constant 0 : i32
    %c0_i32_0 = arith.constant 0 : i32
    %c0_i32_1 = arith.constant 0 : i32
    return %c0_i32, %c0_i32_0 : i32, i32
  }
}

</mosaic_0001>

<llo_original>
// kernel: ae_gat_forward.1
$region0: #{ae_gat_forward.1}
  #allocation0 [shape = 'u32[]', space=smem, size = 0x4, offset = 0x4, fixed_abs, tag = 'smem constant byte address 0x4 - core index']
  #allocation1 [shape = 'u32[144,128]{1,0:T(1,128)}', space=vmem, size = 0x12000, scoped, tag = 'internal scratch']
  #allocation2 [shape = 'bf16[128,128]{1,0:T(16,128)(2,1)}', space=vmem, size = 0x8000, scoped, tag = 'scratch operand']
  %s0 = inlined_call_operand.vmem [shape: bf16[128,128], index: 0, kind: input, shape index: {}]
  %s1 = inlined_call_operand.vmem [shape: f32[128,128], index: 1, kind: input, shape index: {}]
  %s2 = inlined_call_operand.vmem [shape: bf16[4,128,128], index: 2, kind: input, shape index: {}]
  %s3 = inlined_call_operand.vmem [shape: bf16[4,1,128], index: 3, kind: input, shape index: {}]
  %s4 = inlined_call_operand.vmem [shape: bf16[128,128], index: 4, kind: output, shape index: {0}]
  %s5 = inlined_call_operand.vmem [shape: bf16[128,128], index: 5, kind: output, shape index: {1}]
  %6 = xla_tuple %s4, %s5
  %s7 = sld [smem:[#allocation0]]
  $region69: #{ae_gat_forward.1} parent=0
    _
  %s9 = ssub.s32 1, %s7
  %s10 = scalar_select 0, %s9, %s7
  loop: start=0, step=1, limit=6
  $region2: #{ae_gat_forward.1} parent=0 // loop_pre_header
    _
  $region3: #{ae_gat_forward.1} parent=0 // loop_header
    %s12 = sphi 0, %s16
    %p13 = scmp.ge.s32.totalorder %s12, 6
    %s20 = sphi 0, %s20
    %s22 = sphi 0, %s20
    %s23 = sphi 0, %s22
    %s37 = sphi 0, %s23
    %s41 = sphi 0, %s41
    %s43 = sphi 0, %s41
    %s44 = sphi 0, %s43
    %s58 = sphi 0, %s44
    %s64 = sphi 0, %s66
    %s67 = sphi 0, %s64
    %s68 = sphi 0, %s67
    %s84 = sphi 0, %s68
    %s90 = sphi 0, %s92
    %s93 = sphi 0, %s90
    %s94 = sphi 0, %s93
    %s110 = sphi 0, %s94
    %s114 = sphi 0, %s114
    %s116 = sphi 0, %s114
    %s117 = sphi 0, %s116
    %s131 = sphi 0, %s117
    %s135 = sphi 0, %s135
    %s137 = sphi 0, %s135
    %s138 = sphi 0, %s137
    %s152 = sphi 0, %s138
  $region4: #{ae_gat_forward.1} parent=0 // loop_header_branch
    %15 = sbr.rel (%p13) target = $region8
  $region5: #{ae_gat_forward.1} parent=0 // loop_body
    %s17 = ssub.s32 %s12, 1
    %s18 = ssub.s32 %s12, 2
    %s19 = sadd.s32 %s12, 1
    %s21 = sadd.s32 %s20, 1
    %p24 = scmp.eq.s32.totalorder %s12, 3
    %p25 = scmp.ne.s32.totalorder %s20, %s22
    %p26 = scmp.eq.s32.totalorder %s12, 0
    %p27 = por %p25, %p26
    %p28 = scmp.ne.s32.totalorder %s20, %s22
    %p29 = scmp.eq.s32.totalorder %s17, 3
    %p30 = por %p28, %p29
    %p31 = scmp.ne.s32.totalorder %s22, %s23
    %p32 = scmp.eq.s32.totalorder %s17, 0
    %p33 = por %p31, %p32
    %p34 = scmp.ne.s32.totalorder %s22, %s23
    %p35 = scmp.eq.s32.totalorder %s18, 3
    %p36 = por %p34, %p35
    %p38 = scmp.ne.s32.totalorder %s23, %s37
    %p39 = scmp.eq.s32.totalorder %s18, 0
    %p40 = por %p38, %p39
    %s42 = sadd.s32 %s41, 1
    %p45 = scmp.eq.s32.totalorder %s12, 3
    %p46 = scmp.ne.s32.totalorder %s41, %s43
    %p47 = scmp.eq.s32.totalorder %s12, 0
    %p48 = por %p46, %p47
    %p49 = scmp.ne.s32.totalorder %s41, %s43
    %p50 = scmp.eq.s32.totalorder %s17, 3
    %p51 = por %p49, %p50
    %p52 = scmp.ne.s32.totalorder %s43, %s44
    %p53 = scmp.eq.s32.totalorder %s17, 0
    %p54 = por %p52, %p53
    %p55 = scmp.ne.s32.totalorder %s43, %s44
    %p56 = scmp.eq.s32.totalorder %s18, 3
    %p57 = por %p55, %p56
    %p59 = scmp.ne.s32.totalorder %s44, %s58
    %p60 = scmp.eq.s32.totalorder %s18, 0
    %p61 = por %p59, %p60
    %s62 = ssub.s32 %s12, %s19
    %p63 = scmp.eq.s32.totalorder %s62, 0
    %s65 = sadd.s32 %s64, 1
    %s66 = scalar_select %p63, %s64, %s65
    %p69 = pneg %p63
    %p70 = scmp.eq.s32.totalorder %s12, 3
    %p71 = por %p69, %p70
    %p72 = scmp.ne.s32.totalorder %s64, %s67
    %p73 = scmp.eq.s32.totalorder %s12, 0
    %p74 = por %p72, %p73
    %p75 = scmp.ne.s32.totalorder %s64, %s67
    %p76 = scmp.eq.s32.totalorder %s17, 3
    %p77 = por %p75, %p76
    %p78 = scmp.ne.s32.totalorder %s67, %s68
    %p79 = scmp.eq.s32.totalorder %s17, 0
    %p80 = por %p78, %p79
    %p81 = scmp.ne.s32.totalorder %s67, %s68
    %p82 = scmp.eq.s32.totalorder %s18, 3
    %p83 = por %p81, %p82
    %p85 = scmp.ne.s32.totalorder %s68, %s84
    %p86 = scmp.eq.s32.totalorder %s18, 0
    %p87 = por %p85, %p86
    %s88 = ssub.s32 %s12, %s19
    %p89 = scmp.eq.s32.totalorder %s88, 0
    %s91 = sadd.s32 %s90, 1
    %s92 = scalar_select %p89, %s90, %s91
    %p95 = pneg %p89
    %p96 = scmp.eq.s32.totalorder %s12, 3
    %p97 = por %p95, %p96
    %p98 = scmp.ne.s32.totalorder %s90, %s93
    %p99 = scmp.eq.s32.totalorder %s12, 0
    %p100 = por %p98, %p99
    %p101 = scmp.ne.s32.totalorder %s90, %s93
    %p102 = scmp.eq.s32.totalorder %s17, 3
    %p103 = por %p101, %p102
    %p104 = scmp.ne.s32.totalorder %s93, %s94
    %p105 = scmp.eq.s32.totalorder %s17, 0
    %p106 = por %p104, %p105
    %p107 = scmp.ne.s32.totalorder %s93, %s94
    %p108 = scmp.eq.s32.totalorder %s18, 3
    %p109 = por %p107, %p108
    %p111 = scmp.ne.s32.totalorder %s94, %s110
    %p112 = scmp.eq.s32.totalorder %s18, 0
    %p113 = por %p111, %p112
    %s115 = sadd.s32 %s114, 1
    %p118 = scmp.eq.s32.totalorder %s12, 3
    %p119 = scmp.ne.s32.totalorder %s114, %s116
    %p120 = scmp.eq.s32.totalorder %s12, 0
    %p121 = por %p119, %p120
    %p122 = scmp.ne.s32.totalorder %s114, %s116
    %p123 = scmp.eq.s32.totalorder %s17, 3
    %p124 = por %p122, %p123
    %p125 = scmp.ne.s32.totalorder %s116, %s117
    %p126 = scmp.eq.s32.totalorder %s17, 0
    %p127 = por %p125, %p126
    %p128 = scmp.ne.s32.totalorder %s116, %s117
    %p129 = scmp.eq.s32.totalorder %s18, 3
    %p130 = por %p128, %p129
    %p132 = scmp.ne.s32.totalorder %s117, %s131
    %p133 = scmp.eq.s32.totalorder %s18, 0
    %p134 = por %p132, %p133
    %s136 = sadd.s32 %s135, 1
    %p139 = scmp.eq.s32.totalorder %s12, 3
    %p140 = scmp.ne.s32.totalorder %s135, %s137
    %p141 = scmp.eq.s32.totalorder %s12, 0
    %p142 = por %p140, %p141
    %p143 = scmp.ne.s32.totalorder %s135, %s137
    %p144 = scmp.eq.s32.totalorder %s17, 3
    %p145 = por %p143, %p144
    %p146 = scmp.ne.s32.totalorder %s137, %s138
    %p147 = scmp.eq.s32.totalorder %s17, 0
    %p148 = por %p146, %p147
    %p149 = scmp.ne.s32.totalorder %s137, %s138
    %p150 = scmp.eq.s32.totalorder %s18, 3
    %p151 = por %p149, %p150
    %p153 = scmp.ne.s32.totalorder %s138, %s152
    %p154 = scmp.eq.s32.totalorder %s18, 0
    %p155 = por %p153, %p154
    %p156 = scmp.le.s32.totalorder 1, %s12
    %p157 = scmp.lt.s32.totalorder %s12, 5
    %p158 = pnand %p156, %p157
    %p159 = pneg %p158
    // Predicated region
    $region9: #{ae_gat_forward.1} parent=5 // pred_check
      _
    $region10: #{ae_gat_forward.1} parent=5 // pred_check_branch
      %161 = sbr.rel (%p158) target = $region12
    $region11: #{ae_gat_forward.1} parent=5 // pred_region
      %s162 = ssub.s32 %s12, 1
      // Predicated region
      $region13: #{ae_gat_forward.1} parent=11 // pred_check
        %p163 = pneg %p33
      $region14: #{ae_gat_forward.1} parent=11 // pred_check_branch
        %165 = sbr.rel (%p163) target = $region16
      $region15: #{ae_gat_forward.1} parent=11 // pred_region
        _
      $region16: #{ae_gat_forward.1} parent=11 // pred_fallthru
        _
      // Predicated region
      $region17: #{ae_gat_forward.1} parent=11 // pred_check
        %p166 = pneg %p54
      $region18: #{ae_gat_forward.1} parent=11 // pred_check_branch
        %168 = sbr.rel (%p166) target = $region20
      $region19: #{ae_gat_forward.1} parent=11 // pred_region
        _
      $region20: #{ae_gat_forward.1} parent=11 // pred_fallthru
        _
    $region12: #{ae_gat_forward.1} parent=5 // pred_fallthru
      _
    %p169 = scmp.lt.s32.totalorder %s12, 4
    // Predicated region
    $region21: #{ae_gat_forward.1} parent=5 // pred_check
      %p170 = pneg %p169
    $region22: #{ae_gat_forward.1} parent=5 // pred_check_branch
      %172 = sbr.rel (%p170) target = $region24
    $region23: #{ae_gat_forward.1} parent=5 // pred_region
      // Predicated region
      $region25: #{ae_gat_forward.1} parent=23 // pred_check
        %p173 = pneg %p74
      $region26: #{ae_gat_forward.1} parent=23 // pred_check_branch
        %175 = sbr.rel (%p173) target = $region28
      $region27: #{ae_gat_forward.1} parent=23 // pred_region
        %p176 = scmp.lt.s32.totalorder %s12, 3
        %s177 = scalar_select %p176, %s12, 3
        %s178 = smul.addr %s177, 16
        %s179 = smul.addr %s178, 4
        %s180 = scalar_lea.vmem %s2, %s179
      $region28: #{ae_gat_forward.1} parent=23 // pred_fallthru
        _
      // Predicated region
      $region29: #{ae_gat_forward.1} parent=23 // pred_check
        %p181 = pneg %p100
      $region30: #{ae_gat_forward.1} parent=23 // pred_check_branch
        %183 = sbr.rel (%p181) target = $region32
      $region31: #{ae_gat_forward.1} parent=23 // pred_region
        %p184 = scmp.lt.s32.totalorder %s12, 3
        %s185 = scalar_select %p184, %s12, 3
        %s186 = scalar_lea.vmem %s3, %s185
      $region32: #{ae_gat_forward.1} parent=23 // pred_fallthru
        _
    $region24: #{ae_gat_forward.1} parent=5 // pred_fallthru
      _
    %p187 = scmp.le.s32.totalorder 1, %s12
    %p188 = scmp.lt.s32.totalorder %s12, 5
    %p189 = pnand %p187, %p188
    %p190 = pneg %p189
    // Predicated region
    $region33: #{ae_gat_forward.1} parent=5 // pred_check
      _
    $region34: #{ae_gat_forward.1} parent=5 // pred_check_branch
      %192 = sbr.rel (%p189) target = $region36
    $region35: #{ae_gat_forward.1} parent=5 // pred_region
      %s193 = ssub.s32 %s12, 1
      %p194 = pneg %p33
      %p195 = pneg %p30
      %p196 = pneg %p54
      %p197 = pneg %p51
      %p198 = scmp.lt.s32.totalorder %s17, 3
      %s199 = scalar_select %p198, %s17, 3
      %s200 = smul.addr %s199, 16
      %s201 = smul.addr %s200, 4
      %s202 = scalar_lea.vmem %s2, %s201
      %p203 = pneg %p80
      %p204 = pneg %p77
      %p205 = scmp.lt.s32.totalorder %s17, 3
      %s206 = scalar_select %p205, %s17, 3
      %s207 = scalar_lea.vmem %s3, %s206
      %p208 = pneg %p106
      %p209 = pneg %p103
      %p210 = pneg %p127
      %p211 = pneg %p124
      %p212 = pneg %p148
      %p213 = pneg %p145
      %p214 = scmp.lt.s32.totalorder %s17, 3
      %s215 = scalar_select %p214, %s17, 3
      %s216 = smul.addr %s215, 16
      %s217 = smul.addr %s216, 4
      %s218 = scalar_lea.vmem %s2, %s217
      %p219 = scmp.lt.s32.totalorder %s17, 3
      %s220 = scalar_select %p219, %s17, 3
      %s221 = scalar_lea.vmem %s3, %s220
      %p223 = scmp.eq.s32.totalorder %s17, 0
      // Predicated region
      $region37: #{ae_gat_forward.1} parent=35 // pred_check
        %p224 = pneg %p223
      $region38: #{ae_gat_forward.1} parent=35 // pred_check_branch
        %226 = sbr.rel (%p224) target = $region40
      $region39: #{ae_gat_forward.1} parent=35 // pred_region
        %v227 = vld [vmem:[%s0] sm:$0xf]
        %v228 = vld [vmem:[%s0 + $0x4] sm:$0xf]
        %v229 = vld [vmem:[%s0 + $0x8] sm:$0xf]
        %v230 = vld [vmem:[%s0 + $0xc] sm:$0xf]
        %v231 = vld [vmem:[%s0 + $0x10] sm:$0xf]
        %v232 = vld [vmem:[%s0 + $0x14] sm:$0xf]
        %v233 = vld [vmem:[%s0 + $0x18] sm:$0xf]
        %v234 = vld [vmem:[%s0 + $0x1c] sm:$0xf]
        %v235 = vld [vmem:[%s0 + $0x20] sm:$0xf]
        %v236 = vld [vmem:[%s0 + $0x24] sm:$0xf]
        %v237 = vld [vmem:[%s0 + $0x28] sm:$0xf]
        %v238 = vld [vmem:[%s0 + $0x2c] sm:$0xf]
        %v239 = vld [vmem:[%s0 + $0x30] sm:$0xf]
        %v240 = vld [vmem:[%s0 + $0x34] sm:$0xf]
        %v241 = vld [vmem:[%s0 + $0x38] sm:$0xf]
        %v242 = vld [vmem:[%s0 + $0x3c] sm:$0xf]
        %v259 = vunpack.c.l.b16 %v227
        %v260 = vunpack.c.l.b16 %v228
        %v261 = vunpack.c.l.b16 %v229
        %v262 = vunpack.c.l.b16 %v230
        %v263 = vunpack.c.l.b16 %v231
        %v264 = vunpack.c.l.b16 %v232
        %v265 = vunpack.c.l.b16 %v233
        %v266 = vunpack.c.l.b16 %v234
        %v267 = vunpack.c.l.b16 %v235
        %v268 = vunpack.c.l.b16 %v236
        %v269 = vunpack.c.l.b16 %v237
        %v270 = vunpack.c.l.b16 %v238
        %v271 = vunpack.c.l.b16 %v239
        %v272 = vunpack.c.l.b16 %v240
        %v273 = vunpack.c.l.b16 %v241
        %v274 = vunpack.c.l.b16 %v242
        %v275 = vpack.c.b16 %v260, %v259
        %v276 = vpack.c.b16 %v262, %v261
        %v277 = vpack.c.b16 %v264, %v263
        %v278 = vpack.c.b16 %v266, %v265
        %v279 = vpack.c.b16 %v268, %v267
        %v280 = vpack.c.b16 %v270, %v269
        %v281 = vpack.c.b16 %v272, %v271
        %v282 = vpack.c.b16 %v274, %v273
        %291 = vst [vmem:[#allocation2] sm:$0xff] %v275
        %292 = vst [vmem:[#allocation2 + $0x8] sm:$0xff] %v276
        %293 = vst [vmem:[#allocation2 + $0x10] sm:$0xff] %v277
        %294 = vst [vmem:[#allocation2 + $0x18] sm:$0xff] %v278
        %295 = vst [vmem:[#allocation2 + $0x20] sm:$0xff] %v279
        %296 = vst [vmem:[#allocation2 + $0x28] sm:$0xff] %v280
        %297 = vst [vmem:[#allocation2 + $0x30] sm:$0xff] %v281
        %298 = vst [vmem:[#allocation2 + $0x38] sm:$0xff] %v282
      $region40: #{ae_gat_forward.1} parent=35 // pred_fallthru
        _
      %v299 = vld [vmem:[#allocation2] sm:$0xff]
      %v300 = vld [vmem:[#allocation2 + $0x8] sm:$0xff]
      %v301 = vld [vmem:[#allocation2 + $0x10] sm:$0xff]
      %v302 = vld [vmem:[#allocation2 + $0x18] sm:$0xff]
      %v303 = vld [vmem:[#allocation2 + $0x20] sm:$0xff]
      %v304 = vld [vmem:[#allocation2 + $0x28] sm:$0xff]
      %v305 = vld [vmem:[#allocation2 + $0x30] sm:$0xff]
      %v306 = vld [vmem:[#allocation2 + $0x38] sm:$0xff]
      %v307 = vld [vmem:[%s218] sm:$0xf]
      %v308 = vld [vmem:[%s218 + $0x4] sm:$0xf]
      %v309 = vld [vmem:[%s218 + $0x8] sm:$0xf]
      %v310 = vld [vmem:[%s218 + $0xc] sm:$0xf]
      %v311 = vld [vmem:[%s218 + $0x10] sm:$0xf]
      %v312 = vld [vmem:[%s218 + $0x14] sm:$0xf]
      %v313 = vld [vmem:[%s218 + $0x18] sm:$0xf]
      %v314 = vld [vmem:[%s218 + $0x1c] sm:$0xf]
      %v315 = vld [vmem:[%s218 + $0x20] sm:$0xf]
      %v316 = vld [vmem:[%s218 + $0x24] sm:$0xf]
      %v317 = vld [vmem:[%s218 + $0x28] sm:$0xf]
      %v318 = vld [vmem:[%s218 + $0x2c] sm:$0xf]
      %v319 = vld [vmem:[%s218 + $0x30] sm:$0xf]
      %v320 = vld [vmem:[%s218 + $0x34] sm:$0xf]
      %v321 = vld [vmem:[%s218 + $0x38] sm:$0xf]
      %v322 = vld [vmem:[%s218 + $0x3c] sm:$0xf]
      %v323 = vld [vmem:[%s221] sm:$0x1]
      %v340 = vunpack.c.l.b16 %v307
      %v341 = vunpack.c.l.b16 %v308
      %v342 = vunpack.c.l.b16 %v309
      %v343 = vunpack.c.l.b16 %v310
      %v344 = vunpack.c.l.b16 %v311
      %v345 = vunpack.c.l.b16 %v312
      %v346 = vunpack.c.l.b16 %v313
      %v347 = vunpack.c.l.b16 %v314
      %v348 = vunpack.c.l.b16 %v315
      %v349 = vunpack.c.l.b16 %v316
      %v350 = vunpack.c.l.b16 %v317
      %v351 = vunpack.c.l.b16 %v318
      %v352 = vunpack.c.l.b16 %v319
      %v353 = vunpack.c.l.b16 %v320
      %v354 = vunpack.c.l.b16 %v321
      %v355 = vunpack.c.l.b16 %v322
      %v356 = vpack.c.b16 %v341, %v340
      %v357 = vpack.c.b16 %v343, %v342
      %v358 = vpack.c.b16 %v345, %v344
      %v359 = vpack.c.b16 %v347, %v346
      %v360 = vpack.c.b16 %v349, %v348
      %v361 = vpack.c.b16 %v351, %v350
      %v362 = vpack.c.b16 %v353, %v352
      %v363 = vpack.c.b16 %v355, %v354
      %372 = vmatprep.subr.bf16.mxu0 0
      %373 = vmatpush1.bf16.msra.mxu0 %v356
      %374 = vmatprep.subr.bf16.mxu0 0
      %375 = vmatpush1.bf16.msra.mxu0 %v357
      %376 = vmatprep.subr.bf16.mxu0 0
      %377 = vmatpush1.bf16.msra.mxu0 %v358
      %378 = vmatprep.subr.bf16.mxu0 0
      %379 = vmatpush1.bf16.msra.mxu0 %v359
      %380 = vmatprep.subr.bf16.mxu0 0
      %381 = vmatpush1.bf16.msra.mxu0 %v360
      %382 = vmatprep.subr.bf16.mxu0 0
      %383 = vmatpush1.bf16.msra.mxu0 %v361
      %384 = vmatprep.subr.bf16.mxu0 0
      %385 = vmatpush1.bf16.msra.mxu0 %v362
      %386 = vmatprep.subr.bf16.mxu0 0
      %387 = vmatpush1.bf16.msra.mxu0 %v363
      %388 = vmatprep.subr.bf16.mxu0 0
      %389 = vmatpush1.bf16.msra.mxu0 0
      %390 = vmatprep.subr.bf16.mxu0 0
      %391 = vmatpush1.bf16.msra.mxu0 0
      %392 = vmatprep.subr.bf16.mxu0 0
      %393 = vmatpush1.bf16.msra.mxu0 0
      %394 = vmatprep.subr.bf16.mxu0 0
      %395 = vmatpush1.bf16.msra.mxu0 0
      %396 = vmatprep.subr.bf16.mxu0 0
      %397 = vmatpush1.bf16.msra.mxu0 0
      %398 = vmatprep.subr.bf16.mxu0 0
      %399 = vmatpush1.bf16.msra.mxu0 0
      %400 = vmatprep.subr.bf16.mxu0 0
      %401 = vmatpush1.bf16.msra.mxu0 0
      %402 = vmatprep.subr.bf16.mxu0 0
      %403 = vmatpush1.bf16.msra.mxu0 0
      %404 = vmatprep.mubr.bf16.mxu0 0
      %405 = vmatmul.mubr.bf16.gmra.mrb[0].mxu0 %v299
      %v406 = vpop.f32.mrb[0].mxu0
      %v407 = vadd.f32 0.0, %v406
      %v408 = vpop.f32.mrb[0].mxu0
      %v409 = vpop.f32.mrb[0].mxu0
      %v410 = vadd.f32 0.0, %v409
      %v411 = vpop.f32.mrb[0].mxu0
      %412 = vmatprep.mubr.bf16.mxu0 0
      %413 = vmatmul.mubr.bf16.gmra.mrb[0].mxu0 %v300
      %v414 = vpop.f32.mrb[0].mxu0
      %v415 = vadd.f32 0.0, %v414
      %v416 = vpop.f32.mrb[0].mxu0
      %v417 = vpop.f32.mrb[0].mxu0
      %v418 = vadd.f32 0.0, %v417
      %v419 = vpop.f32.mrb[0].mxu0
      %420 = vmatprep.mubr.bf16.mxu0 0
      %421 = vmatmul.mubr.bf16.gmra.mrb[0].mxu0 %v301
      %v422 = vpop.f32.mrb[0].mxu0
      %v423 = vadd.f32 0.0, %v422
      %v424 = vpop.f32.mrb[0].mxu0
      %v425 = vpop.f32.mrb[0].mxu0
      %v426 = vadd.f32 0.0, %v425
      %v427 = vpop.f32.mrb[0].mxu0
      %428 = vmatprep.mubr.bf16.mxu0 0
      %429 = vmatmul.mubr.bf16.gmra.mrb[0].mxu0 %v302
      %v430 = vpop.f32.mrb[0].mxu0
      %v431 = vadd.f32 0.0, %v430
      %v432 = vpop.f32.mrb[0].mxu0
      %v433 = vpop.f32.mrb[0].mxu0
      %v434 = vadd.f32 0.0, %v433
      %v435 = vpop.f32.mrb[0].mxu0
      %436 = vmatprep.mubr.bf16.mxu0 0
      %437 = vmatmul.mubr.bf16.gmra.mrb[0].mxu0 %v303
      %v438 = vpop.f32.mrb[0].mxu0
      %v439 = vadd.f32 0.0, %v438
      %v440 = vpop.f32.mrb[0].mxu0
      %v441 = vpop.f32.mrb[0].mxu0
      %v442 = vadd.f32 0.0, %v441
      %v443 = vpop.f32.mrb[0].mxu0
      %444 = vmatprep.mubr.bf16.mxu0 0
      %445 = vmatmul.mubr.bf16.gmra.mrb[0].mxu0 %v304
      %v446 = vpop.f32.mrb[0].mxu0
      %v447 = vadd.f32 0.0, %v446
      %v448 = vpop.f32.mrb[0].mxu0
      %v449 = vpop.f32.mrb[0].mxu0
      %v450 = vadd.f32 0.0, %v449
      %v451 = vpop.f32.mrb[0].mxu0
      %452 = vmatprep.mubr.bf16.mxu0 0
      %453 = vmatmul.mubr.bf16.gmra.mrb[0].mxu0 %v305
      %v454 = vpop.f32.mrb[0].mxu0
      %v455 = vadd.f32 0.0, %v454
      %v456 = vpop.f32.mrb[0].mxu0
      %v457 = vpop.f32.mrb[0].mxu0
      %v458 = vadd.f32 0.0, %v457
      %v459 = vpop.f32.mrb[0].mxu0
      %460 = vmatprep.mubr.bf16.mxu0 0
      %461 = vmatmul.mubr.bf16.gmra.mrb[0].mxu0 %v306
      %v462 = vpop.f32.mrb[0].mxu0
      %v463 = vadd.f32 0.0, %v462
      %v464 = vpop.f32.mrb[0].mxu0
      %v465 = vpop.f32.mrb[0].mxu0
      %v466 = vadd.f32 0.0, %v465
      %v467 = vpop.f32.mrb[0].mxu0
      %468 = vdwg.mxu0
      %469 = vmatprep.subr.bf16.mxu0 0
      %470 = vmatpush1.bf16.xpose.msra.mxu0 %v299
      %471 = vmatprep.subr.bf16.mxu0 0
      %472 = vmatpush1.bf16.xpose.msra.mxu0 %v300
      %473 = vmatprep.subr.bf16.mxu0 0
      %474 = vmatpush1.bf16.xpose.msra.mxu0 %v301
      %475 = vmatprep.subr.bf16.mxu0 0
      %476 = vmatpush1.bf16.xpose.msra.mxu0 %v302
      %477 = vmatprep.subr.bf16.mxu0 0
      %478 = vmatpush1.bf16.xpose.msra.mxu0 %v303
      %479 = vmatprep.subr.bf16.mxu0 0
      %480 = vmatpush1.bf16.xpose.msra.mxu0 %v304
      %481 = vmatprep.subr.bf16.mxu0 0
      %482 = vmatpush1.bf16.xpose.msra.mxu0 %v305
      %483 = vmatprep.subr.bf16.mxu0 0
      %484 = vmatpush1.bf16.xpose.msra.mxu0 %v306
      %485 = vmatprep.subr.bf16.mxu0 0
      %486 = vmatpush1.bf16.xpose.msra.mxu0 0
      %487 = vmatprep.subr.bf16.mxu0 0
      %488 = vmatpush1.bf16.xpose.msra.mxu0 0
      %489 = vmatprep.subr.bf16.mxu0 0
      %490 = vmatpush1.bf16.xpose.msra.mxu0 0
      %491 = vmatprep.subr.bf16.mxu0 0
      %492 = vmatpush1.bf16.xpose.msra.mxu0 0
      %493 = vmatprep.subr.bf16.mxu0 0
      %494 = vmatpush1.bf16.xpose.msra.mxu0 0
      %495 = vmatprep.subr.bf16.mxu0 0
      %496 = vmatpush1.bf16.xpose.msra.mxu0 0
      %497 = vmatprep.subr.bf16.mxu0 0
      %498 = vmatpush1.bf16.xpose.msra.mxu0 0
      %499 = vmatprep.subr.bf16.mxu0 0
      %500 = vmatpush1.bf16.xpose.msra.mxu0 0
      %501 = vmatprep.mubr.bf16.mxu0 0
      %502 = vmatmul.mubr.bf16.gmra.mrb[0].mxu0 %v323
      %v503 = vpop.f32.mrb[0].mxu0
      %v504 = vadd.f32 0.0, %v503
      %v505 = vpop.f32.mrb[0].mxu0
      %v506 = vpop.f32.mrb[0].mxu0
      %v507 = vpop.f32.mrb[0].mxu0
      %508 = vdwg.mxu0
      %510 = vset.pattern.permute.xlu0 127
      %511 = vperm.xlu0 %510, %v407
      %v512 = vpop.permute.xlu0 %511
      %515 = vset.pattern.permute.xlu0 127
      %516 = vperm.xlu0 %515, %v410
      %v517 = vpop.permute.xlu0 %516
      %520 = vset.pattern.permute.xlu0 127
      %521 = vperm.xlu0 %520, %v415
      %v522 = vpop.permute.xlu0 %521
      %525 = vset.pattern.permute.xlu0 127
      %526 = vperm.xlu0 %525, %v418
      %v527 = vpop.permute.xlu0 %526
      %530 = vset.pattern.permute.xlu0 127
      %531 = vperm.xlu0 %530, %v423
      %v532 = vpop.permute.xlu0 %531
      %535 = vset.pattern.permute.xlu0 127
      %536 = vperm.xlu0 %535, %v426
      %v537 = vpop.permute.xlu0 %536
      %540 = vset.pattern.permute.xlu0 127
      %541 = vperm.xlu0 %540, %v431
      %v542 = vpop.permute.xlu0 %541
      %545 = vset.pattern.permute.xlu0 127
      %546 = vperm.xlu0 %545, %v434
      %v547 = vpop.permute.xlu0 %546
      %550 = vset.pattern.permute.xlu0 127
      %551 = vperm.xlu0 %550, %v439
      %v552 = vpop.permute.xlu0 %551
      %555 = vset.pattern.permute.xlu0 127
      %556 = vperm.xlu0 %555, %v442
      %v557 = vpop.permute.xlu0 %556
      %560 = vset.pattern.permute.xlu0 127
      %561 = vperm.xlu0 %560, %v447
      %v562 = vpop.permute.xlu0 %561
      %565 = vset.pattern.permute.xlu0 127
      %566 = vperm.xlu0 %565, %v450
      %v567 = vpop.permute.xlu0 %566
      %570 = vset.pattern.permute.xlu0 127
      %571 = vperm.xlu0 %570, %v455
      %v572 = vpop.permute.xlu0 %571
      %575 = vset.pattern.permute.xlu0 127
      %576 = vperm.xlu0 %575, %v458
      %v577 = vpop.permute.xlu0 %576
      %580 = vset.pattern.permute.xlu0 127
      %581 = vperm.xlu0 %580, %v463
      %v582 = vpop.permute.xlu0 %581
      %585 = vset.pattern.permute.xlu0 127
      %586 = vperm.xlu0 %585, %v466
      %v587 = vpop.permute.xlu0 %586
      %v589 = vlaneseq
      %v590 = vshrl.u32 %v589, 7
      %v591 = vsub.s32 0, %v590
      %v592 = vrot.slane %v504, %v591
      %v593 = vadd.f32 %v512, %v592
      %v594 = vadd.f32 %v517, %v592
      %v595 = vadd.f32 %v522, %v592
      %v596 = vadd.f32 %v527, %v592
      %v597 = vadd.f32 %v532, %v592
      %v598 = vadd.f32 %v537, %v592
      %v599 = vadd.f32 %v542, %v592
      %v600 = vadd.f32 %v547, %v592
      %v601 = vadd.f32 %v552, %v592
      %v602 = vadd.f32 %v557, %v592
      %v603 = vadd.f32 %v562, %v592
      %v604 = vadd.f32 %v567, %v592
      %v605 = vadd.f32 %v572, %v592
      %v606 = vadd.f32 %v577, %v592
      %v607 = vadd.f32 %v582, %v592
      %v608 = vadd.f32 %v587, %v592
      %v609 = vmul.f32 %v593, 0.2
      %v610 = vmul.f32 %v594, 0.2
      %v611 = vmul.f32 %v595, 0.2
      %v612 = vmul.f32 %v596, 0.2
      %v613 = vmul.f32 %v597, 0.2
      %v614 = vmul.f32 %v598, 0.2
      %v615 = vmul.f32 %v599, 0.2
      %v616 = vmul.f32 %v600, 0.2
      %v617 = vmul.f32 %v601, 0.2
      %v618 = vmul.f32 %v602, 0.2
      %v619 = vmul.f32 %v603, 0.2
      %v620 = vmul.f32 %v604, 0.2
      %v621 = vmul.f32 %v605, 0.2
      %v622 = vmul.f32 %v606, 0.2
      %v623 = vmul.f32 %v607, 0.2
      %v624 = vmul.f32 %v608, 0.2
      %v625 = vmax.f32 %v593, %v609
      %v626 = vmax.f32 %v594, %v610
      %v627 = vmax.f32 %v595, %v611
      %v628 = vmax.f32 %v596, %v612
      %v629 = vmax.f32 %v597, %v613
      %v630 = vmax.f32 %v598, %v614
      %v631 = vmax.f32 %v599, %v615
      %v632 = vmax.f32 %v600, %v616
      %v633 = vmax.f32 %v601, %v617
      %v634 = vmax.f32 %v602, %v618
      %v635 = vmax.f32 %v603, %v619
      %v636 = vmax.f32 %v604, %v620
      %v637 = vmax.f32 %v605, %v621
      %v638 = vmax.f32 %v606, %v622
      %v639 = vmax.f32 %v607, %v623
      %v640 = vmax.f32 %v608, %v624
      %v641 = vld [vmem:[%s1] sm:$0xff]
      %v642 = vld [vmem:[%s1 + $0x8] sm:$0xff]
      %v643 = vld [vmem:[%s1 + $0x10] sm:$0xff]
      %v644 = vld [vmem:[%s1 + $0x18] sm:$0xff]
      %v645 = vld [vmem:[%s1 + $0x20] sm:$0xff]
      %v646 = vld [vmem:[%s1 + $0x28] sm:$0xff]
      %v647 = vld [vmem:[%s1 + $0x30] sm:$0xff]
      %v648 = vld [vmem:[%s1 + $0x38] sm:$0xff]
      %v649 = vld [vmem:[%s1 + $0x40] sm:$0xff]
      %v650 = vld [vmem:[%s1 + $0x48] sm:$0xff]
      %v651 = vld [vmem:[%s1 + $0x50] sm:$0xff]
      %v652 = vld [vmem:[%s1 + $0x58] sm:$0xff]
      %v653 = vld [vmem:[%s1 + $0x60] sm:$0xff]
      %v654 = vld [vmem:[%s1 + $0x68] sm:$0xff]
      %v655 = vld [vmem:[%s1 + $0x70] sm:$0xff]
      %v656 = vld [vmem:[%s1 + $0x78] sm:$0xff]
      %v657 = vadd.f32 %v625, %v641
      %v658 = vadd.f32 %v626, %v642
      %v659 = vadd.f32 %v627, %v643
      %v660 = vadd.f32 %v628, %v644
      %v661 = vadd.f32 %v629, %v645
      %v662 = vadd.f32 %v630, %v646
      %v663 = vadd.f32 %v631, %v647
      %v664 = vadd.f32 %v632, %v648
      %v665 = vadd.f32 %v633, %v649
      %v666 = vadd.f32 %v634, %v650
      %v667 = vadd.f32 %v635, %v651
      %v668 = vadd.f32 %v636, %v652
      %v669 = vadd.f32 %v637, %v653
      %v670 = vadd.f32 %v638, %v654
      %v671 = vadd.f32 %v639, %v655
      %v672 = vadd.f32 %v640, %v656
      %673 = vmax.xlane.f32.xlu0 %v657
      %v674 = vpop.xlane.xlu0 %673
      %675 = vmax.xlane.f32.xlu0 %v658
      %v676 = vpop.xlane.xlu0 %675
      %677 = vmax.xlane.f32.xlu0 %v659
      %v678 = vpop.xlane.xlu0 %677
      %679 = vmax.xlane.f32.xlu0 %v660
      %v680 = vpop.xlane.xlu0 %679
      %681 = vmax.xlane.f32.xlu0 %v661
      %v682 = vpop.xlane.xlu0 %681
      %683 = vmax.xlane.f32.xlu0 %v662
      %v684 = vpop.xlane.xlu0 %683
      %685 = vmax.xlane.f32.xlu0 %v663
      %v686 = vpop.xlane.xlu0 %685
      %687 = vmax.xlane.f32.xlu0 %v664
      %v688 = vpop.xlane.xlu0 %687
      %689 = vmax.xlane.f32.xlu0 %v665
      %v690 = vpop.xlane.xlu0 %689
      %691 = vmax.xlane.f32.xlu0 %v666
      %v692 = vpop.xlane.xlu0 %691
      %693 = vmax.xlane.f32.xlu0 %v667
      %v694 = vpop.xlane.xlu0 %693
      %695 = vmax.xlane.f32.xlu0 %v668
      %v696 = vpop.xlane.xlu0 %695
      %697 = vmax.xlane.f32.xlu0 %v669
      %v698 = vpop.xlane.xlu0 %697
      %699 = vmax.xlane.f32.xlu0 %v670
      %v700 = vpop.xlane.xlu0 %699
      %701 = vmax.xlane.f32.xlu0 %v671
      %v702 = vpop.xlane.xlu0 %701
      %703 = vmax.xlane.f32.xlu0 %v672
      %v704 = vpop.xlane.xlu0 %703
      %v705 = vsub.f32 %v657, %v674
      %v706 = vsub.f32 %v658, %v676
      %v707 = vsub.f32 %v659, %v678
      %v708 = vsub.f32 %v660, %v680
      %v709 = vsub.f32 %v661, %v682
      %v710 = vsub.f32 %v662, %v684
      %v711 = vsub.f32 %v663, %v686
      %v712 = vsub.f32 %v664, %v688
      %v713 = vsub.f32 %v665, %v690
      %v714 = vsub.f32 %v666, %v692
      %v715 = vsub.f32 %v667, %v694
      %v716 = vsub.f32 %v668, %v696
      %v717 = vsub.f32 %v669, %v698
      %v718 = vsub.f32 %v670, %v700
      %v719 = vsub.f32 %v671, %v702
      %v720 = vsub.f32 %v672, %v704
      %v721 = vmul.f32 %v705, 1.442695
      %v722 = vpow.pop %v721
      %v723 = vmul.f32 %v706, 1.442695
      %v724 = vpow.pop %v723
      %v725 = vmul.f32 %v707, 1.442695
      %v726 = vpow.pop %v725
      %v727 = vmul.f32 %v708, 1.442695
      %v728 = vpow.pop %v727
      %v729 = vmul.f32 %v709, 1.442695
      %v730 = vpow.pop %v729
      %v731 = vmul.f32 %v710, 1.442695
      %v732 = vpow.pop %v731
      %v733 = vmul.f32 %v711, 1.442695
      %v734 = vpow.pop %v733
      %v735 = vmul.f32 %v712, 1.442695
      %v736 = vpow.pop %v735
      %v737 = vmul.f32 %v713, 1.442695
      %v738 = vpow.pop %v737
      %v739 = vmul.f32 %v714, 1.442695
      %v740 = vpow.pop %v739
      %v741 = vmul.f32 %v715, 1.442695
      %v742 = vpow.pop %v741
      %v743 = vmul.f32 %v716, 1.442695
      %v744 = vpow.pop %v743
      %v745 = vmul.f32 %v717, 1.442695
      %v746 = vpow.pop %v745
      %v747 = vmul.f32 %v718, 1.442695
      %v748 = vpow.pop %v747
      %v749 = vmul.f32 %v719, 1.442695
      %v750 = vpow.pop %v749
      %v751 = vmul.f32 %v720, 1.442695
      %v752 = vpow.pop %v751
      %753 = vadd.xlane.f32.xlu0 %v722
      %v754 = vpop.xlane.xlu0 %753
      %755 = vadd.xlane.f32.xlu0 %v724
      %v756 = vpop.xlane.xlu0 %755
      %757 = vadd.xlane.f32.xlu0 %v726
      %v758 = vpop.xlane.xlu0 %757
      %759 = vadd.xlane.f32.xlu0 %v728
      %v760 = vpop.xlane.xlu0 %759
      %761 = vadd.xlane.f32.xlu0 %v730
      %v762 = vpop.xlane.xlu0 %761
      %763 = vadd.xlane.f32.xlu0 %v732
      %v764 = vpop.xlane.xlu0 %763
      %765 = vadd.xlane.f32.xlu0 %v734
      %v766 = vpop.xlane.xlu0 %765
      %767 = vadd.xlane.f32.xlu0 %v736
      %v768 = vpop.xlane.xlu0 %767
      %769 = vadd.xlane.f32.xlu0 %v738
      %v770 = vpop.xlane.xlu0 %769
      %771 = vadd.xlane.f32.xlu0 %v740
      %v772 = vpop.xlane.xlu0 %771
      %773 = vadd.xlane.f32.xlu0 %v742
      %v774 = vpop.xlane.xlu0 %773
      %775 = vadd.xlane.f32.xlu0 %v744
      %v776 = vpop.xlane.xlu0 %775
      %777 = vadd.xlane.f32.xlu0 %v746
      %v778 = vpop.xlane.xlu0 %777
      %779 = vadd.xlane.f32.xlu0 %v748
      %v780 = vpop.xlane.xlu0 %779
      %781 = vadd.xlane.f32.xlu0 %v750
      %v782 = vpop.xlane.xlu0 %781
      %783 = vadd.xlane.f32.xlu0 %v752
      %v784 = vpop.xlane.xlu0 %783
      %v785 = vpack.c.bf16 %v724, %v722
      %v786 = vpack.c.bf16 %v728, %v726
      %v787 = vpack.c.bf16 %v732, %v730
      %v788 = vpack.c.bf16 %v736, %v734
      %v789 = vpack.c.bf16 %v740, %v738
      %v790 = vpack.c.bf16 %v744, %v742
      %v791 = vpack.c.bf16 %v748, %v746
      %v792 = vpack.c.bf16 %v752, %v750
      %v793 = vpack.c.bf16 %v410, %v407
      %v794 = vpack.c.bf16 %v418, %v415
      %v795 = vpack.c.bf16 %v426, %v423
      %v796 = vpack.c.bf16 %v434, %v431
      %v797 = vpack.c.bf16 %v442, %v439
      %v798 = vpack.c.bf16 %v450, %v447
      %v799 = vpack.c.bf16 %v458, %v455
      %v800 = vpack.c.bf16 %v466, %v463
      %801 = vmatprep.subr.bf16.mxu0 0
      %802 = vmatpush1.bf16.msra.mxu0 %v793
      %803 = vmatprep.subr.bf16.mxu0 0
      %804 = vmatpush1.bf16.msra.mxu0 %v794
      %805 = vmatprep.subr.bf16.mxu0 0
      %806 = vmatpush1.bf16.msra.mxu0 %v795
      %807 = vmatprep.subr.bf16.mxu0 0
      %808 = vmatpush1.bf16.msra.mxu0 %v796
      %809 = vmatprep.subr.bf16.mxu0 0
      %810 = vmatpush1.bf16.msra.mxu0 %v797
      %811 = vmatprep.subr.bf16.mxu0 0
      %812 = vmatpush1.bf16.msra.mxu0 %v798
      %813 = vmatprep.subr.bf16.mxu0 0
      %814 = vmatpush1.bf16.msra.mxu0 %v799
      %815 = vmatprep.subr.bf16.mxu0 0
      %816 = vmatpush1.bf16.msra.mxu0 %v800
      %817 = vmatprep.subr.bf16.mxu0 0
      %818 = vmatpush1.bf16.msra.mxu0 0
      %819 = vmatprep.subr.bf16.mxu0 0
      %820 = vmatpush1.bf16.msra.mxu0 0
      %821 = vmatprep.subr.bf16.mxu0 0
      %822 = vmatpush1.bf16.msra.mxu0 0
      %823 = vmatprep.subr.bf16.mxu0 0
      %824 = vmatpush1.bf16.msra.mxu0 0
      %825 = vmatprep.subr.bf16.mxu0 0
      %826 = vmatpush1.bf16.msra.mxu0 0
      %827 = vmatprep.subr.bf16.mxu0 0
      %828 = vmatpush1.bf16.msra.mxu0 0
      %829 = vmatprep.subr.bf16.mxu0 0
      %830 = vmatpush1.bf16.msra.mxu0 0
      %831 = vmatprep.subr.bf16.mxu0 0
      %832 = vmatpush1.bf16.msra.mxu0 0
      %833 = vmatprep.mubr.bf16.mxu0 0
      %834 = vmatmul.mubr.bf16.gmra.mrb[0].mxu0 %v785
      %v835 = vpop.f32.mrb[0].mxu0
      %v836 = vadd.f32 0.0, %v835
      %v837 = vpop.f32.mrb[0].mxu0
      %v838 = vpop.f32.mrb[0].mxu0
      %v839 = vadd.f32 0.0, %v838
      %v840 = vpop.f32.mrb[0].mxu0
      %841 = vmatprep.mubr.bf16.mxu0 0
      %842 = vmatmul.mubr.bf16.gmra.mrb[0].mxu0 %v786
      %v843 = vpop.f32.mrb[0].mxu0
      %v844 = vadd.f32 0.0, %v843
      %v845 = vpop.f32.mrb[0].mxu0
      %v846 = vpop.f32.mrb[0].mxu0
      %v847 = vadd.f32 0.0, %v846
      %v848 = vpop.f32.mrb[0].mxu0
      %849 = vmatprep.mubr.bf16.mxu0 0
      %850 = vmatmul.mubr.bf16.gmra.mrb[0].mxu0 %v787
      %v851 = vpop.f32.mrb[0].mxu0
      %v852 = vadd.f32 0.0, %v851
      %v853 = vpop.f32.mrb[0].mxu0
      %v854 = vpop.f32.mrb[0].mxu0
      %v855 = vadd.f32 0.0, %v854
      %v856 = vpop.f32.mrb[0].mxu0
      %857 = vmatprep.mubr.bf16.mxu0 0
      %858 = vmatmul.mubr.bf16.gmra.mrb[0].mxu0 %v788
      %v859 = vpop.f32.mrb[0].mxu0
      %v860 = vadd.f32 0.0, %v859
      %v861 = vpop.f32.mrb[0].mxu0
      %v862 = vpop.f32.mrb[0].mxu0
      %v863 = vadd.f32 0.0, %v862
      %v864 = vpop.f32.mrb[0].mxu0
      %865 = vmatprep.mubr.bf16.mxu0 0
      %866 = vmatmul.mubr.bf16.gmra.mrb[0].mxu0 %v789
      %v867 = vpop.f32.mrb[0].mxu0
      %v868 = vadd.f32 0.0, %v867
      %v869 = vpop.f32.mrb[0].mxu0
      %v870 = vpop.f32.mrb[0].mxu0
      %v871 = vadd.f32 0.0, %v870
      %v872 = vpop.f32.mrb[0].mxu0
      %873 = vmatprep.mubr.bf16.mxu0 0
      %874 = vmatmul.mubr.bf16.gmra.mrb[0].mxu0 %v790
      %v875 = vpop.f32.mrb[0].mxu0
      %v876 = vadd.f32 0.0, %v875
      %v877 = vpop.f32.mrb[0].mxu0
      %v878 = vpop.f32.mrb[0].mxu0
      %v879 = vadd.f32 0.0, %v878
      %v880 = vpop.f32.mrb[0].mxu0
      %881 = vmatprep.mubr.bf16.mxu0 0
      %882 = vmatmul.mubr.bf16.gmra.mrb[0].mxu0 %v791
      %v883 = vpop.f32.mrb[0].mxu0
      %v884 = vadd.f32 0.0, %v883
      %v885 = vpop.f32.mrb[0].mxu0
      %v886 = vpop.f32.mrb[0].mxu0
      %v887 = vadd.f32 0.0, %v886
      %v888 = vpop.f32.mrb[0].mxu0
      %889 = vmatprep.mubr.bf16.mxu0 0
      %890 = vmatmul.mubr.bf16.gmra.mrb[0].mxu0 %v792
      %v891 = vpop.f32.mrb[0].mxu0
      %v892 = vadd.f32 0.0, %v891
      %v893 = vpop.f32.mrb[0].mxu0
      %v894 = vpop.f32.mrb[0].mxu0
      %v895 = vadd.f32 0.0, %v894
      %v896 = vpop.f32.mrb[0].mxu0
      %897 = vdwg.mxu0
      %v898 = vrcp.pop %v754
      %v899 = vrcp.pop %v756
      %v900 = vrcp.pop %v758
      %v901 = vrcp.pop %v760
      %v902 = vrcp.pop %v762
      %v903 = vrcp.pop %v764
      %v904 = vrcp.pop %v766
      %v905 = vrcp.pop %v768
      %v906 = vrcp.pop %v770
      %v907 = vrcp.pop %v772
      %v908 = vrcp.pop %v774
      %v909 = vrcp.pop %v776
      %v910 = vrcp.pop %v778
      %v911 = vrcp.pop %v780
      %v912 = vrcp.pop %v782
      %v913 = vrcp.pop %v784
      %v914 = vmul.f32 %v836, %v898
      %v915 = vmul.f32 %v839, %v899
      %v916 = vmul.f32 %v844, %v900
      %v917 = vmul.f32 %v847, %v901
      %v918 = vmul.f32 %v852, %v902
      %v919 = vmul.f32 %v855, %v903
      %v920 = vmul.f32 %v860, %v904
      %v921 = vmul.f32 %v863, %v905
      %v922 = vmul.f32 %v868, %v906
      %v923 = vmul.f32 %v871, %v907
      %v924 = vmul.f32 %v876, %v908
      %v925 = vmul.f32 %v879, %v909
      %v926 = vmul.f32 %v884, %v910
      %v927 = vmul.f32 %v887, %v911
      %v928 = vmul.f32 %v892, %v912
      %v929 = vmul.f32 %v895, %v913
      %vm930 = vcmp.gt.f32.partialorder %v914, 0.0
      %vm931 = vcmp.gt.f32.partialorder %v915, 0.0
      %vm932 = vcmp.gt.f32.partialorder %v916, 0.0
      %vm933 = vcmp.gt.f32.partialorder %v917, 0.0
      %vm934 = vcmp.gt.f32.partialorder %v918, 0.0
      %vm935 = vcmp.gt.f32.partialorder %v919, 0.0
      %vm936 = vcmp.gt.f32.partialorder %v920, 0.0
      %vm937 = vcmp.gt.f32.partialorder %v921, 0.0
      %vm938 = vcmp.gt.f32.partialorder %v922, 0.0
      %vm939 = vcmp.gt.f32.partialorder %v923, 0.0
      %vm940 = vcmp.gt.f32.partialorder %v924, 0.0
      %vm941 = vcmp.gt.f32.partialorder %v925, 0.0
      %vm942 = vcmp.gt.f32.partialorder %v926, 0.0
      %vm943 = vcmp.gt.f32.partialorder %v927, 0.0
      %vm944 = vcmp.gt.f32.partialorder %v928, 0.0
      %vm945 = vcmp.gt.f32.partialorder %v929, 0.0
      %v946 = vmin.f32 %v914, 0.0
      %v947 = vmin.f32 %v915, 0.0
      %v948 = vmin.f32 %v916, 0.0
      %v949 = vmin.f32 %v917, 0.0
      %v950 = vmin.f32 %v918, 0.0
      %v951 = vmin.f32 %v919, 0.0
      %v952 = vmin.f32 %v920, 0.0
      %v953 = vmin.f32 %v921, 0.0
      %v954 = vmin.f32 %v922, 0.0
      %v955 = vmin.f32 %v923, 0.0
      %v956 = vmin.f32 %v924, 0.0
      %v957 = vmin.f32 %v925, 0.0
      %v958 = vmin.f32 %v926, 0.0
      %v959 = vmin.f32 %v927, 0.0
      %v960 = vmin.f32 %v928, 0.0
      %v961 = vmin.f32 %v929, 0.0
      %v962 = vmul.f32 %v946, 1.442695
      %v963 = vpow.pop %v962
      %v964 = vmul.f32 %v947, 1.442695
      %v965 = vpow.pop %v964
      %v966 = vmul.f32 %v948, 1.442695
      %v967 = vpow.pop %v966
      %v968 = vmul.f32 %v949, 1.442695
      %v969 = vpow.pop %v968
      %v970 = vmul.f32 %v950, 1.442695
      %v971 = vpow.pop %v970
      %v972 = vmul.f32 %v951, 1.442695
      %v973 = vpow.pop %v972
      %v974 = vmul.f32 %v952, 1.442695
      %v975 = vpow.pop %v974
      %v976 = vmul.f32 %v953, 1.442695
      %v977 = vpow.pop %v976
      %v978 = vmul.f32 %v954, 1.442695
      %v979 = vpow.pop %v978
      %v980 = vmul.f32 %v955, 1.442695
      %v981 = vpow.pop %v980
      %v982 = vmul.f32 %v956, 1.442695
      %v983 = vpow.pop %v982
      %v984 = vmul.f32 %v957, 1.442695
      %v985 = vpow.pop %v984
      %v986 = vmul.f32 %v958, 1.442695
      %v987 = vpow.pop %v986
      %v988 = vmul.f32 %v959, 1.442695
      %v989 = vpow.pop %v988
      %v990 = vmul.f32 %v960, 1.442695
      %v991 = vpow.pop %v990
      %v992 = vmul.f32 %v961, 1.442695
      %v993 = vpow.pop %v992
      %v994 = vsub.f32 %v963, 1.0
      %v995 = vsub.f32 %v965, 1.0
      %v996 = vsub.f32 %v967, 1.0
      %v997 = vsub.f32 %v969, 1.0
      %v998 = vsub.f32 %v971, 1.0
      %v999 = vsub.f32 %v973, 1.0
      %v1000 = vsub.f32 %v975, 1.0
      %v1001 = vsub.f32 %v977, 1.0
      %v1002 = vsub.f32 %v979, 1.0
      %v1003 = vsub.f32 %v981, 1.0
      %v1004 = vsub.f32 %v983, 1.0
      %v1005 = vsub.f32 %v985, 1.0
      %v1006 = vsub.f32 %v987, 1.0
      %v1007 = vsub.f32 %v989, 1.0
      %v1008 = vsub.f32 %v991, 1.0
      %v1009 = vsub.f32 %v993, 1.0
      %v1010 = vsel %vm930, %v914, %v994
      %v1011 = vsel %vm931, %v915, %v995
      %v1012 = vsel %vm932, %v916, %v996
      %v1013 = vsel %vm933, %v917, %v997
      %v1014 = vsel %vm934, %v918, %v998
      %v1015 = vsel %vm935, %v919, %v999
      %v1016 = vsel %vm936, %v920, %v1000
      %v1017 = vsel %vm937, %v921, %v1001
      %v1018 = vsel %vm938, %v922, %v1002
      %v1019 = vsel %vm939, %v923, %v1003
      %v1020 = vsel %vm940, %v924, %v1004
      %v1021 = vsel %vm941, %v925, %v1005
      %v1022 = vsel %vm942, %v926, %v1006
      %v1023 = vsel %vm943, %v927, %v1007
      %v1024 = vsel %vm944, %v928, %v1008
      %v1025 = vsel %vm945, %v929, %v1009
      %v1026 = vpack.c.bf16 %v1011, %v1010
      %v1027 = vpack.c.bf16 %v1013, %v1012
      %v1028 = vpack.c.bf16 %v1015, %v1014
      %v1029 = vpack.c.bf16 %v1017, %v1016
      %v1030 = vpack.c.bf16 %v1019, %v1018
      %v1031 = vpack.c.bf16 %v1021, %v1020
      %v1032 = vpack.c.bf16 %v1023, %v1022
      %v1033 = vpack.c.bf16 %v1025, %v1024
      %1034 = vst [vmem:[#allocation2] sm:$0xff] %v1026
      %1035 = vst [vmem:[#allocation2 + $0x8] sm:$0xff] %v1027
      %1036 = vst [vmem:[#allocation2 + $0x10] sm:$0xff] %v1028
      %1037 = vst [vmem:[#allocation2 + $0x18] sm:$0xff] %v1029
      %1038 = vst [vmem:[#allocation2 + $0x20] sm:$0xff] %v1030
      %1039 = vst [vmem:[#allocation2 + $0x28] sm:$0xff] %v1031
      %1040 = vst [vmem:[#allocation2 + $0x30] sm:$0xff] %v1032
      %1041 = vst [vmem:[#allocation2 + $0x38] sm:$0xff] %v1033
      %p1042 = scmp.eq.s32.totalorder %s17, 1
      // Predicated region
      $region41: #{ae_gat_forward.1} parent=35 // pred_check
        %p1043 = pneg %p1042
      $region42: #{ae_gat_forward.1} parent=35 // pred_check_branch
        %1045 = sbr.rel (%p1043) target = $region44
      $region43: #{ae_gat_forward.1} parent=35 // pred_region
        %v1054 = vunpack.c.l.b16 %v1026
        %v1055 = vunpack.c.h.b16 %v1026
        %v1056 = vunpack.c.l.b16 %v1027
        %v1057 = vunpack.c.h.b16 %v1027
        %v1058 = vunpack.c.l.b16 %v1028
        %v1059 = vunpack.c.h.b16 %v1028
        %v1060 = vunpack.c.l.b16 %v1029
        %v1061 = vunpack.c.h.b16 %v1029
        %v1062 = vunpack.c.l.b16 %v1030
        %v1063 = vunpack.c.h.b16 %v1030
        %v1064 = vunpack.c.l.b16 %v1031
        %v1065 = vunpack.c.h.b16 %v1031
        %v1066 = vunpack.c.l.b16 %v1032
        %v1067 = vunpack.c.h.b16 %v1032
        %v1068 = vunpack.c.l.b16 %v1033
        %v1069 = vunpack.c.h.b16 %v1033
        %v1070 = vpack.c.b16 %v1054, %v1054
        %v1071 = vpack.c.b16 %v1055, %v1055
        %v1072 = vpack.c.b16 %v1056, %v1056
        %v1073 = vpack.c.b16 %v1057, %v1057
        %v1074 = vpack.c.b16 %v1058, %v1058
        %v1075 = vpack.c.b16 %v1059, %v1059
        %v1076 = vpack.c.b16 %v1060, %v1060
        %v1077 = vpack.c.b16 %v1061, %v1061
        %v1078 = vpack.c.b16 %v1062, %v1062
        %v1079 = vpack.c.b16 %v1063, %v1063
        %v1080 = vpack.c.b16 %v1064, %v1064
        %v1081 = vpack.c.b16 %v1065, %v1065
        %v1082 = vpack.c.b16 %v1066, %v1066
        %v1083 = vpack.c.b16 %v1067, %v1067
        %v1084 = vpack.c.b16 %v1068, %v1068
        %v1085 = vpack.c.b16 %v1069, %v1069
        %1102 = vst [vmem:[%s4] sm:$0xf] %v1070
        %1103 = vst [vmem:[%s4 + $0x4] sm:$0xf] %v1071
        %1104 = vst [vmem:[%s4 + $0x8] sm:$0xf] %v1072
        %1105 = vst [vmem:[%s4 + $0xc] sm:$0xf] %v1073
        %1106 = vst [vmem:[%s4 + $0x10] sm:$0xf] %v1074
        %1107 = vst [vmem:[%s4 + $0x14] sm:$0xf] %v1075
        %1108 = vst [vmem:[%s4 + $0x18] sm:$0xf] %v1076
        %1109 = vst [vmem:[%s4 + $0x1c] sm:$0xf] %v1077
        %1110 = vst [vmem:[%s4 + $0x20] sm:$0xf] %v1078
        %1111 = vst [vmem:[%s4 + $0x24] sm:$0xf] %v1079
        %1112 = vst [vmem:[%s4 + $0x28] sm:$0xf] %v1080
        %1113 = vst [vmem:[%s4 + $0x2c] sm:$0xf] %v1081
        %1114 = vst [vmem:[%s4 + $0x30] sm:$0xf] %v1082
        %1115 = vst [vmem:[%s4 + $0x34] sm:$0xf] %v1083
        %1116 = vst [vmem:[%s4 + $0x38] sm:$0xf] %v1084
        %1117 = vst [vmem:[%s4 + $0x3c] sm:$0xf] %v1085
      $region44: #{ae_gat_forward.1} parent=35 // pred_fallthru
        _
      %p1118 = scmp.eq.s32.totalorder %s17, 3
      // Predicated region
      $region45: #{ae_gat_forward.1} parent=35 // pred_check
        %p1119 = pneg %p1118
      $region46: #{ae_gat_forward.1} parent=35 // pred_check_branch
        %1121 = sbr.rel (%p1119) target = $region48
      $region47: #{ae_gat_forward.1} parent=35 // pred_region
        %v1130 = vunpack.c.l.b16 %v1026
        %v1131 = vunpack.c.h.b16 %v1026
        %v1132 = vunpack.c.l.b16 %v1027
        %v1133 = vunpack.c.h.b16 %v1027
        %v1134 = vunpack.c.l.b16 %v1028
        %v1135 = vunpack.c.h.b16 %v1028
        %v1136 = vunpack.c.l.b16 %v1029
        %v1137 = vunpack.c.h.b16 %v1029
        %v1138 = vunpack.c.l.b16 %v1030
        %v1139 = vunpack.c.h.b16 %v1030
        %v1140 = vunpack.c.l.b16 %v1031
        %v1141 = vunpack.c.h.b16 %v1031
        %v1142 = vunpack.c.l.b16 %v1032
        %v1143 = vunpack.c.h.b16 %v1032
        %v1144 = vunpack.c.l.b16 %v1033
        %v1145 = vunpack.c.h.b16 %v1033
        %v1146 = vpack.c.b16 %v1130, %v1130
        %v1147 = vpack.c.b16 %v1131, %v1131
        %v1148 = vpack.c.b16 %v1132, %v1132
        %v1149 = vpack.c.b16 %v1133, %v1133
        %v1150 = vpack.c.b16 %v1134, %v1134
        %v1151 = vpack.c.b16 %v1135, %v1135
        %v1152 = vpack.c.b16 %v1136, %v1136
        %v1153 = vpack.c.b16 %v1137, %v1137
        %v1154 = vpack.c.b16 %v1138, %v1138
        %v1155 = vpack.c.b16 %v1139, %v1139
        %v1156 = vpack.c.b16 %v1140, %v1140
        %v1157 = vpack.c.b16 %v1141, %v1141
        %v1158 = vpack.c.b16 %v1142, %v1142
        %v1159 = vpack.c.b16 %v1143, %v1143
        %v1160 = vpack.c.b16 %v1144, %v1144
        %v1161 = vpack.c.b16 %v1145, %v1145
        %1178 = vst [vmem:[%s5] sm:$0xf] %v1146
        %1179 = vst [vmem:[%s5 + $0x4] sm:$0xf] %v1147
        %1180 = vst [vmem:[%s5 + $0x8] sm:$0xf] %v1148
        %1181 = vst [vmem:[%s5 + $0xc] sm:$0xf] %v1149
        %1182 = vst [vmem:[%s5 + $0x10] sm:$0xf] %v1150
        %1183 = vst [vmem:[%s5 + $0x14] sm:$0xf] %v1151
        %1184 = vst [vmem:[%s5 + $0x18] sm:$0xf] %v1152
        %1185 = vst [vmem:[%s5 + $0x1c] sm:$0xf] %v1153
        %1186 = vst [vmem:[%s5 + $0x20] sm:$0xf] %v1154
        %1187 = vst [vmem:[%s5 + $0x24] sm:$0xf] %v1155
        %1188 = vst [vmem:[%s5 + $0x28] sm:$0xf] %v1156
        %1189 = vst [vmem:[%s5 + $0x2c] sm:$0xf] %v1157
        %1190 = vst [vmem:[%s5 + $0x30] sm:$0xf] %v1158
        %1191 = vst [vmem:[%s5 + $0x34] sm:$0xf] %v1159
        %1192 = vst [vmem:[%s5 + $0x38] sm:$0xf] %v1160
        %1193 = vst [vmem:[%s5 + $0x3c] sm:$0xf] %v1161
      $region48: #{ae_gat_forward.1} parent=35 // pred_fallthru
        _
      // Predicated region
      $region49: #{ae_gat_forward.1} parent=35 // pred_check
        %p1194 = pneg %p124
      $region50: #{ae_gat_forward.1} parent=35 // pred_check_branch
        %1196 = sbr.rel (%p1194) target = $region52
      $region51: #{ae_gat_forward.1} parent=35 // pred_region
        _
      $region52: #{ae_gat_forward.1} parent=35 // pred_fallthru
        _
      // Predicated region
      $region53: #{ae_gat_forward.1} parent=35 // pred_check
        %p1197 = pneg %p145
      $region54: #{ae_gat_forward.1} parent=35 // pred_check_branch
        %1199 = sbr.rel (%p1197) target = $region56
      $region55: #{ae_gat_forward.1} parent=35 // pred_region
        _
      $region56: #{ae_gat_forward.1} parent=35 // pred_fallthru
        _
      // Predicated region
      $region57: #{ae_gat_forward.1} parent=35 // pred_check
        %p1200 = pneg %p124
      $region58: #{ae_gat_forward.1} parent=35 // pred_check_branch
        %1202 = sbr.rel (%p1200) target = $region60
      $region59: #{ae_gat_forward.1} parent=35 // pred_region
        _
      $region60: #{ae_gat_forward.1} parent=35 // pred_fallthru
        _
      // Predicated region
      $region61: #{ae_gat_forward.1} parent=35 // pred_check
        %p1203 = pneg %p145
      $region62: #{ae_gat_forward.1} parent=35 // pred_check_branch
        %1205 = sbr.rel (%p1203) target = $region64
      $region63: #{ae_gat_forward.1} parent=35 // pred_region
        _
      $region64: #{ae_gat_forward.1} parent=35 // pred_fallthru
        _
    $region36: #{ae_gat_forward.1} parent=5 // pred_fallthru
      _
    %p1206 = scmp.le.s32.totalorder 2, %s12
    // Predicated region
    $region65: #{ae_gat_forward.1} parent=5 // pred_check
      %p1207 = pneg %p1206
    $region66: #{ae_gat_forward.1} parent=5 // pred_check_branch
      %1209 = sbr.rel (%p1207) target = $region68
    $region67: #{ae_gat_forward.1} parent=5 // pred_region
      %s1210 = ssub.s32 %s12, 2
    $region68: #{ae_gat_forward.1} parent=5 // pred_fallthru
      _
  $region6: #{ae_gat_forward.1} parent=0 // loop_footer
    %s16 = sadd.s32 1, %s12
  $region7: #{ae_gat_forward.1} parent=0 // loop_footer_branch
    %11 = sbr.rel target = $region3
  $region8: #{ae_gat_forward.1} parent=0 // loop_exit
    _

</llo_original>
